<compile_context>
chip_gen: v7x
topology: tpu7x:2x2x1
jax: 0.10.0
libtpu: 0.0.40
codegen_flags: <defaults>
</compile_context>

<pallas_src>
import jax
import jax.numpy as jnp
from jax.experimental import pallas as pl
from jax.experimental.pallas import tpu as pltpu

_LANE = 128


def _round_up(a, b):
    return ((a + b - 1) // b) * b


def _round_down(a, b):
    return (a // b) * b


def _sublane(itemsize):
    # sublane packing per dtype width: f32 -> 8, bf16 -> 16, int8/fp8 -> 32
    return {4: 8, 2: 16, 1: 32}.get(itemsize, 8)


def _make_kernel(entries, compute_dtype):
    """entries: list of (x_start, x_width, [(t_start, width, out_start), ...])."""

    def kernel(x_ref, m_ref, o_ref):
        m = m_ref[...]
        for xs, xw, stores in entries:
            xv = x_ref[:, xs:xs + xw]
            if xv.dtype != compute_dtype:
                xv = xv.astype(compute_dtype)
            # One-hot matmul -> exact lane-replication (f32 accumulation).
            t = jnp.dot(xv, m, preferred_element_type=jnp.float32)
            t = t.astype(o_ref.dtype)
            for ts, tw, os_ in stores:
                o_ref[:, os_:os_ + tw] = t[:, ts:ts + tw]

    return kernel


def upsampling_nearest2d(x: jax.Array, scale: int) -> jax.Array:
    """Pallas TPU implementation of UpSampling(scale).forward(x), x in NCHW."""
    s = int(scale)
    assert s == scale and s >= 1, "only integer scale factors are supported"
    # TODO(synk): non-integer scale_factor (index-rounding nearest) not implemented.
    if s == 1:
        return x

    N, C, H, W = x.shape
    Ho, Wo = H * s, W * s
    R = N * C * H          # flattened input rows
    L = s * s * W          # output footprint (lanes) of one input row

    itemsize = jnp.dtype(x.dtype).itemsize
    sublane = _sublane(itemsize)

    if jnp.issubdtype(x.dtype, jnp.floating):
        compute_dtype = x.dtype          # one-hot matmul + f32 acc is exact
    else:
        # TODO(synk): integer dtypes go through the float MXU path (exact only
        # for |x| < 2**24); v7x has no integer matmul path.
        compute_dtype = jnp.float32
    m_itemsize = jnp.dtype(compute_dtype).itemsize

    # ---- choose row grouping g (small / unaligned L) ------------------------
    g = 1
    if W <= 256 and L % _LANE != 0:
        for cand in range(2, 65):
            if (cand * L) % _LANE == 0 and R % cand == 0 and cand * W <= 256:
                g = cand
                break

    Rg = R // g            # rows of the (grouped) 2-D views
    Wg = g * W             # input row width of the grouped view
    Lg = g * L             # output row width of the grouped view

    # ---- static compute plan (per grouped row) -------------------------------
    if g > 1:
        # one block-diagonal matmul over the whole grouped row, then g*s stores
        xw = Wg
        entries = [(0, xw,
                    [(i * Wo, Wo, (i * s + k) * Wo)
                     for i in range(g) for k in range(s)])]
    else:
        # chunk the contraction axis for large W (tail chunk overlaps: rewrites
        # identical values, so it is correct for any W)
        Wc = min(W, 256)
        starts = list(range(0, W - Wc + 1, Wc))
        if starts[-1] + Wc < W:
            starts.append(W - Wc)
        xw = Wc
        entries = [(xs, Wc,
                    [(0, s * Wc, k * Wo + xs * s) for k in range(s)])
                   for xs in starts]

    # One-hot lane-replication matrix: M[q, l] = 1 iff l // s == q.
    # (For the grouped case this is automatically block-diagonal.)
    mcols = jnp.arange(s * xw, dtype=jnp.int32)
    mrows = jnp.arange(xw, dtype=jnp.int32)
    m = (mcols[None, :] // s == mrows[:, None]).astype(compute_dtype)

    x2 = x.reshape(Rg, Wg)                 # free reshape (row-major)

    # ---- honest VMEM budget & per-generation sizing --------------------------
    try:
        info = pltpu.get_tpu_info()
        vmem_cap = int(getattr(info, "vmem_capacity_bytes", 0)) or (64 << 20)
    except Exception:
        vmem_cap = 64 << 20                # v7x per-TC physical; conservative
    budget = max(8 << 20, min(32 << 20, vmem_cap // 4))
    vmem_limit = int(max(32 << 20, min(vmem_cap * 3 // 4, 100 << 20)))

    m_bytes = xw * (s * xw) * m_itemsize * 2      # M (with double-buffer slack)
    t_bytes = (s * xw) * 4 * 2                    # f32 intermediate (+ cast copy)
    per_row = (Wg + Lg) * itemsize * 2 + t_bytes  # double-buffered in + out
    avail = max(budget - m_bytes, per_row * sublane)
    cap_rows = max(sublane, _round_down(avail // per_row, sublane))

    if Rg <= cap_rows and (Rg <= sublane or Rg % sublane == 0):
        r_blk = Rg
    else:
        r_blk = min(cap_rows, _round_up(Rg, sublane))
    # Prefer >= ~4 grid steps: v7x splits 'parallel' axes across its 2 TCs and
    # >= 2 steps is needed for any DMA/compute overlap in the pipeline.
    if Rg >= 4 * sublane:
        r_blk = min(r_blk, max(sublane, _round_up(pl.cdiv(Rg, 4), sublane)))
    grid = (pl.cdiv(Rg, r_blk),)           # partial last block is masked

    flops = int(2 * Rg * len(entries) * xw * (s * xw))
    bytes_accessed = int((R * W + R * L) * itemsize + xw * s * xw * m_itemsize)
    cost = pl.CostEstimate(flops=flops, transcendentals=0,
                           bytes_accessed=bytes_accessed)

    out2 = pl.pallas_call(
        _make_kernel(entries, compute_dtype),
        out_shape=jax.ShapeDtypeStruct((Rg, Lg), x.dtype),
        grid=grid,
        in_specs=[
            pl.BlockSpec((r_blk, Wg), lambda i: (i, 0)),
            # constant block index -> fetched once, stays resident in VMEM
            pl.BlockSpec((xw, s * xw), lambda i: (0, 0)),
        ],
        out_specs=pl.BlockSpec((r_blk, Lg), lambda i: (i, 0)),
        compiler_params=pltpu.CompilerParams(
            dimension_semantics=("parallel",),
            vmem_limit_bytes=vmem_limit,
        ),
        cost_estimate=cost,
    )(x2, m)

    # (Rg, g*s*s*W) and (N, C, Ho, Wo) share the same row-major flat layout.
    return out2.reshape(N, C, Ho, Wo)


def _reference_nearest2d(x: jax.Array, scale: int) -> jax.Array:
    # Pure-JAX reference: y[n, c, i, j] = x[n, c, i // s, j // s]
    ih = jnp.arange(x.shape[2] * scale) // scale
    iw = jnp.arange(x.shape[3] * scale) // scale
    return x[:, :, ih][:, :, :, iw]


if __name__ == "__main__":
    key = jax.random.PRNGKey(0)

    cases = [
        ((2, 4, 16, 16), 2, jnp.float32),   # grouped path (L=64 < 128)
        ((1, 3, 8, 32), 2, jnp.float32),    # plain shrunk-matmul path (L=128)
        ((2, 2, 4, 8), 3, jnp.bfloat16),    # bf16 + odd scale, grouped path
    ]

    for shape, scale, dtype in cases:
        key, sub = jax.random.split(key)
        x = jax.random.normal(sub, shape, dtype=jnp.float32).astype(dtype)

        y = upsampling_nearest2d(x, scale)
        y = jax.block_until_ready(y)

        y_ref = _reference_nearest2d(x, scale)
        N, C, H, W = shape
        assert y.shape == (N, C, H * scale, W * scale), y.shape
        assert y.dtype == x.dtype
        assert jnp.allclose(y.astype(jnp.float32), y_ref.astype(jnp.float32),
                            atol=1e-6, rtol=1e-6), "mismatch vs reference"

    print("KERNEL_OK")
</pallas_src>

<mosaic_0001>
module attributes {stable_mosaic.version = 11 : i64} {
  func.func @kernel(%arg0: i32, %arg1: memref<16x32xf32, #tpu.memory_space<vmem>>, %arg2: memref<32x64xf32, #tpu.memory_space<vmem>>, %arg3: memref<16x128xf32, #tpu.memory_space<vmem>>) attributes {dimension_semantics = [#tpu.dimension_semantics<parallel>], iteration_bounds = array<i64: 4>, scalar_prefetch = 0 : i64, scratch_operands = 0 : i64, tpu.core_type = #tpu.core_type<tc>, window_params = [{transform_indices = @transform_0, window_bounds = array<i64: 16, 32>}, {pipeline_mode = #tpu.pipeline_mode<synchronous>, transform_indices = @transform_1, window_bounds = array<i64: 32, 64>}, {transform_indices = @transform_2, window_bounds = array<i64: 16, 128>}]} {
    %c0 = arith.constant 0 : index
    %c0_0 = arith.constant 0 : index
    %0 = vector.load %arg2[%c0, %c0_0] : memref<32x64xf32, #tpu.memory_space<vmem>>, vector<32x64xf32>
    %c0_1 = arith.constant 0 : index
    %c0_2 = arith.constant 0 : index
    %1 = vector.load %arg1[%c0_1, %c0_2] : memref<16x32xf32, #tpu.memory_space<vmem>>, vector<16x32xf32>
    %cst = arith.constant dense<0.000000e+00> : vector<16x64xf32>
    %2 = tpu.matmul %1, %0, %cst {dimension_numbers = #tpu.dot_dimension_numbers<[1], [0], [0], [1], [0, 0, 1, 1], [], []>} : vector<16x32xf32>, vector<32x64xf32>, vector<16x64xf32> -> vector<16x64xf32>
    %3 = vector.extract_strided_slice %2 {offsets = [0, 0], sizes = [16, 32], strides = [1, 1]} : vector<16x64xf32> to vector<16x32xf32>
    %c0_3 = arith.constant 0 : index
    %c0_4 = arith.constant 0 : index
    %4 = vector.load %arg3[%c0_3, %c0_4] : memref<16x128xf32, #tpu.memory_space<vmem>>, vector<16x32xf32>
    tpu.vector_store %arg3[%c0_3, %c0_4], %3 {strides = array<i32>} : memref<16x128xf32, #tpu.memory_space<vmem>>, vector<16x32xf32>,
    %5 = vector.extract_strided_slice %2 {offsets = [0, 0], sizes = [16, 32], strides = [1, 1]} : vector<16x64xf32> to vector<16x32xf32>
    %c0_5 = arith.constant 0 : index
    %c32 = arith.constant 32 : index
    %6 = vector.load %arg3[%c0_5, %c32] : memref<16x128xf32, #tpu.memory_space<vmem>>, vector<16x32xf32>
    tpu.vector_store %arg3[%c0_5, %c32], %5 {strides = array<i32>} : memref<16x128xf32, #tpu.memory_space<vmem>>, vector<16x32xf32>,
    %7 = vector.extract_strided_slice %2 {offsets = [0, 32], sizes = [16, 32], strides = [1, 1]} : vector<16x64xf32> to vector<16x32xf32>
    %c0_6 = arith.constant 0 : index
    %c64 = arith.constant 64 : index
    %8 = vector.load %arg3[%c0_6, %c64] : memref<16x128xf32, #tpu.memory_space<vmem>>, vector<16x32xf32>
    tpu.vector_store %arg3[%c0_6, %c64], %7 {strides = array<i32>} : memref<16x128xf32, #tpu.memory_space<vmem>>, vector<16x32xf32>,
    %9 = vector.extract_strided_slice %2 {offsets = [0, 32], sizes = [16, 32], strides = [1, 1]} : vector<16x64xf32> to vector<16x32xf32>
    %c0_7 = arith.constant 0 : index
    %c96 = arith.constant 96 : index
    %10 = vector.load %arg3[%c0_7, %c96] : memref<16x128xf32, #tpu.memory_space<vmem>>, vector<16x32xf32>
    tpu.vector_store %arg3[%c0_7, %c96], %9 {strides = array<i32>} : memref<16x128xf32, #tpu.memory_space<vmem>>, vector<16x32xf32>,
    return
  }
  func.func @transform_0(%arg0: i32) -> (i32, i32) {
    %c0_i32 = arith.constant 0 : i32
    %c0_i32_0 = arith.constant 0 : i32
    return %arg0, %c0_i32 : i32, i32
  }
  func.func @transform_1(%arg0: i32) -> (i32, i32) {
    %c0_i32 = arith.constant 0 : i32
    %c0_i32_0 = arith.constant 0 : i32
    %c0_i32_1 = arith.constant 0 : i32
    return %c0_i32, %c0_i32_0 : i32, i32
  }
  func.func @transform_2(%arg0: i32) -> (i32, i32) {
    %c0_i32 = arith.constant 0 : i32
    %c0_i32_0 = arith.constant 0 : i32
    return %arg0, %c0_i32 : i32, i32
  }
}

</mosaic_0001>

<llo_original>
// kernel: tpu_custom_call.1
$region0: #{tpu_custom_call.1}
  #allocation0 [shape = 'u32[]', space=smem, size = 0x4, offset = 0x4, fixed_abs, tag = 'smem constant byte address 0x4 - core index']
  #allocation1 [shape = 'u32[144,128]{1,0:T(1,128)}', space=vmem, size = 0x12000, scoped, tag = 'internal scratch']
  %s0 = inlined_call_operand.vmem [shape: f32[64,32], index: 0, kind: input, shape index: {}]
  %s1 = inlined_call_operand.vmem [shape: f32[32,64], index: 1, kind: input, shape index: {}]
  %s2 = inlined_call_operand.hbm [shape: f32[64,128], index: 2, kind: output, shape index: {}]
  %s3 = sld [smem:[#allocation0]]
  $region41: #{tpu_custom_call.1} parent=0
    _
  %s5 = ssub.s32 1, %s3
  %s6 = scalar_select 0, %s5, %s3
  $region1: #{tpu_custom_call.1} parent=0
    #allocation2 [shape = 'u8[16384]{0}', space=vmem, size = 0x4000, scoped, tag = 'output window, operand 0']
    #allocation3 [shape = 's32[2]{0}', space=sflag, size = 0x8, scoped, tag = 'scoped memory for tpu_custom_call.1']
    %7 = vsyncpa [#allocation3], 0
    %s8 = scalar_lea.sflag [#allocation3], 1
    %9 = vsyncpa %s8, 0
    loop: start=0, step=1, limit=6
    $region2: #{tpu_custom_call.1} parent=1 // loop_pre_header
      _
    $region3: #{tpu_custom_call.1} parent=1 // loop_header
      %s11 = sphi 0, %s15
      %p12 = scmp.ge.s32.totalorder %s11, 6
      %s21 = sphi 0, %s23
      %s24 = sphi 0, %s21
      %s25 = sphi 0, %s24
      %s41 = sphi 0, %s25
      %s45 = sphi 0, %s45
      %s47 = sphi 0, %s45
      %s48 = sphi 0, %s47
      %s62 = sphi 0, %s48
      %s68 = sphi 0, %s70
      %s71 = sphi 0, %s68
      %s72 = sphi 0, %s71
      %s88 = sphi 0, %s72
    $region4: #{tpu_custom_call.1} parent=1 // loop_header_branch
      %14 = sbr.rel (%p12) target = $region8
    $region5: #{tpu_custom_call.1} parent=1 // loop_body
      %s16 = ssub.s32 %s11, 1
      %s17 = ssub.s32 %s11, 2
      %s18 = sadd.s32 %s11, 1
      %s19 = ssub.s32 %s11, %s18
      %p20 = scmp.eq.s32.totalorder %s19, 0
      %s22 = sadd.s32 %s21, 1
      %s23 = scalar_select %p20, %s21, %s22
      %p26 = pneg %p20
      %p27 = scmp.eq.s32.totalorder %s11, 3
      %p28 = por %p26, %p27
      %p29 = scmp.ne.s32.totalorder %s21, %s24
      %p30 = scmp.eq.s32.totalorder %s11, 0
      %p31 = por %p29, %p30
      %p32 = scmp.ne.s32.totalorder %s21, %s24
      %p33 = scmp.eq.s32.totalorder %s16, 3
      %p34 = por %p32, %p33
      %p35 = scmp.ne.s32.totalorder %s24, %s25
      %p36 = scmp.eq.s32.totalorder %s16, 0
      %p37 = por %p35, %p36
      %p38 = scmp.ne.s32.totalorder %s24, %s25
      %p39 = scmp.eq.s32.totalorder %s17, 3
      %p40 = por %p38, %p39
      %p42 = scmp.ne.s32.totalorder %s25, %s41
      %p43 = scmp.eq.s32.totalorder %s17, 0
      %p44 = por %p42, %p43
      %s46 = sadd.s32 %s45, 1
      %p49 = scmp.eq.s32.totalorder %s11, 3
      %p50 = scmp.ne.s32.totalorder %s45, %s47
      %p51 = scmp.eq.s32.totalorder %s11, 0
      %p52 = por %p50, %p51
      %p53 = scmp.ne.s32.totalorder %s45, %s47
      %p54 = scmp.eq.s32.totalorder %s16, 3
      %p55 = por %p53, %p54
      %p56 = scmp.ne.s32.totalorder %s47, %s48
      %p57 = scmp.eq.s32.totalorder %s16, 0
      %p58 = por %p56, %p57
      %p59 = scmp.ne.s32.totalorder %s47, %s48
      %p60 = scmp.eq.s32.totalorder %s17, 3
      %p61 = por %p59, %p60
      %p63 = scmp.ne.s32.totalorder %s48, %s62
      %p64 = scmp.eq.s32.totalorder %s17, 0
      %p65 = por %p63, %p64
      %s66 = ssub.s32 %s11, %s18
      %p67 = scmp.eq.s32.totalorder %s66, 0
      %s69 = sadd.s32 %s68, 1
      %s70 = scalar_select %p67, %s68, %s69
      %p73 = pneg %p67
      %p74 = scmp.eq.s32.totalorder %s11, 3
      %p75 = por %p73, %p74
      %p76 = scmp.ne.s32.totalorder %s68, %s71
      %p77 = scmp.eq.s32.totalorder %s11, 0
      %p78 = por %p76, %p77
      %p79 = scmp.ne.s32.totalorder %s68, %s71
      %p80 = scmp.eq.s32.totalorder %s16, 3
      %p81 = por %p79, %p80
      %p82 = scmp.ne.s32.totalorder %s71, %s72
      %p83 = scmp.eq.s32.totalorder %s16, 0
      %p84 = por %p82, %p83
      %p85 = scmp.ne.s32.totalorder %s71, %s72
      %p86 = scmp.eq.s32.totalorder %s17, 3
      %p87 = por %p85, %p86
      %p89 = scmp.ne.s32.totalorder %s72, %s88
      %p90 = scmp.eq.s32.totalorder %s17, 0
      %p91 = por %p89, %p90
      %p92 = scmp.le.s32.totalorder 1, %s11
      %p93 = scmp.lt.s32.totalorder %s11, 5
      %p94 = pnand %p92, %p93
      %p95 = pneg %p94
      // Predicated region
      $region9: #{tpu_custom_call.1} parent=5 // pred_check
        _
      $region10: #{tpu_custom_call.1} parent=5 // pred_check_branch
        %97 = sbr.rel (%p94) target = $region12
      $region11: #{tpu_custom_call.1} parent=5 // pred_region
        %s98 = ssub.s32 %s11, 1
        // Predicated region
        $region13: #{tpu_custom_call.1} parent=11 // pred_check
          %p99 = pneg %p58
        $region14: #{tpu_custom_call.1} parent=11 // pred_check_branch
          %101 = sbr.rel (%p99) target = $region16
        $region15: #{tpu_custom_call.1} parent=11 // pred_region
          _
        $region16: #{tpu_custom_call.1} parent=11 // pred_fallthru
          _
      $region12: #{tpu_custom_call.1} parent=5 // pred_fallthru
        _
      %p102 = scmp.lt.s32.totalorder %s11, 4
      // Predicated region
      $region17: #{tpu_custom_call.1} parent=5 // pred_check
        %p103 = pneg %p102
      $region18: #{tpu_custom_call.1} parent=5 // pred_check_branch
        %105 = sbr.rel (%p103) target = $region20
      $region19: #{tpu_custom_call.1} parent=5 // pred_region
        // Predicated region
        $region21: #{tpu_custom_call.1} parent=19 // pred_check
          %p106 = pneg %p31
        $region22: #{tpu_custom_call.1} parent=19 // pred_check_branch
          %108 = sbr.rel (%p106) target = $region24
        $region23: #{tpu_custom_call.1} parent=19 // pred_region
          %s109 = smul.u32 2, %s11
          %p110 = scmp.lt.s32.totalorder %s109, 7
          %s111 = scalar_select %p110, %s109, 7
          %s112 = smul.addr %s111, 8
          %s113 = scalar_lea.vmem %s0, %s112
          %s114 = smul.u32 2, %s11
        $region24: #{tpu_custom_call.1} parent=19 // pred_fallthru
          _
      $region20: #{tpu_custom_call.1} parent=5 // pred_fallthru
        _
      %p115 = scmp.le.s32.totalorder 1, %s11
      %p116 = scmp.lt.s32.totalorder %s11, 5
      %p117 = pnand %p115, %p116
      %p118 = pneg %p117
      // Predicated region
      $region25: #{tpu_custom_call.1} parent=5 // pred_check
        _
      $region26: #{tpu_custom_call.1} parent=5 // pred_check_branch
        %120 = sbr.rel (%p117) target = $region28
      $region27: #{tpu_custom_call.1} parent=5 // pred_region
        %s121 = ssub.s32 %s11, 1
        %s122 = smul.u32 2, %s16
        %p123 = scmp.lt.s32.totalorder %s122, 7
        %s124 = scalar_select %p123, %s122, 7
        %s125 = smul.addr %s124, 8
        %s126 = scalar_lea.vmem %s0, %s125
        %p127 = pneg %p37
        %p128 = pneg %p34
        %p129 = pneg %p58
        %p130 = pneg %p55
        %p131 = pneg %p84
        %p132 = pneg %p81
        %s133 = sand.u32 %s71, 1
        %s134 = scalar_lea.sflag [#allocation3], %s133
        %s135 = sand.u32 %s71, 1
        %s136 = smul.addr %s135, 16
        %s137 = scalar_lea.vmem [#allocation2], %s136
        %s138 = smul.u32 2, %s16
        %p139 = scmp.lt.s32.totalorder %s138, 7
        %s140 = scalar_select %p139, %s138, 7
        %s141 = smul.addr %s140, 8
        %s142 = scalar_lea.vmem %s0, %s141
        %s143 = smul.u32 2, %s16
        %s144 = smul.u32 2, %s16
        %v145 = vld [vmem:[%s1] sm:$0xff]
        %v146 = vld [vmem:[%s1 + $0x8] sm:$0xff]
        %v147 = vld [vmem:[%s1 + $0x10] sm:$0xff]
        %v148 = vld [vmem:[%s1 + $0x18] sm:$0xff]
        %v149 = vld [vmem:[%s142] sm:$0xff]
        %v150 = vld [vmem:[%s142 + $0x8] sm:$0xff]
        %vm151 = vcmask 261120
        %v153 = vsel %vm151, %v149, 0
        %v156 = vsel %vm151, %v150, 0
        %158 = vmatprep.subr.mxu0 0.0
        %159 = vmatpush1.msra.mxu0 %v145
        %160 = vmatprep.subr.mxu0 0.0
        %161 = vmatpush1.msra.mxu0 %v146
        %162 = vmatprep.subr.mxu0 0.0
        %163 = vmatpush1.msra.mxu0 %v147
        %164 = vmatprep.subr.mxu0 0.0
        %165 = vmatpush1.msra.mxu0 %v148
        %166 = vmatprep.subr.mxu0 0.0
        %167 = vmatpush1.msra.mxu0 0.0
        %168 = vmatprep.subr.mxu0 0.0
        %169 = vmatpush1.msra.mxu0 0.0
        %170 = vmatprep.subr.mxu0 0.0
        %171 = vmatpush1.msra.mxu0 0.0
        %172 = vmatprep.subr.mxu0 0.0
        %173 = vmatpush1.msra.mxu0 0.0
        %174 = vmatprep.subr.mxu0 0.0
        %175 = vmatpush1.msra.mxu0 0.0
        %176 = vmatprep.subr.mxu0 0.0
        %177 = vmatpush1.msra.mxu0 0.0
        %178 = vmatprep.subr.mxu0 0.0
        %179 = vmatpush1.msra.mxu0 0.0
        %180 = vmatprep.subr.mxu0 0.0
        %181 = vmatpush1.msra.mxu0 0.0
        %182 = vmatprep.subr.mxu0 0.0
        %183 = vmatpush1.msra.mxu0 0.0
        %184 = vmatprep.subr.mxu0 0.0
        %185 = vmatpush1.msra.mxu0 0.0
        %186 = vmatprep.subr.mxu0 0.0
        %187 = vmatpush1.msra.mxu0 0.0
        %188 = vmatprep.subr.mxu0 0.0
        %189 = vmatpush1.msra.mxu0 0.0
        %190 = vmatprep.subr.mxu0 0.0
        %191 = vmatpush1.msra.mxu0 0.0
        %192 = vmatprep.subr.mxu0 0.0
        %193 = vmatpush1.msra.mxu0 0.0
        %194 = vmatprep.subr.mxu0 0.0
        %195 = vmatpush1.msra.mxu0 0.0
        %196 = vmatprep.subr.mxu0 0.0
        %197 = vmatpush1.msra.mxu0 0.0
        %198 = vmatprep.subr.mxu0 0.0
        %199 = vmatpush1.msra.mxu0 0.0
        %200 = vmatprep.subr.mxu0 0.0
        %201 = vmatpush1.msra.mxu0 0.0
        %202 = vmatprep.subr.mxu0 0.0
        %203 = vmatpush1.msra.mxu0 0.0
        %204 = vmatprep.subr.mxu0 0.0
        %205 = vmatpush1.msra.mxu0 0.0
        %206 = vmatprep.subr.mxu0 0.0
        %207 = vmatpush1.msra.mxu0 0.0
        %208 = vmatprep.subr.mxu0 0.0
        %209 = vmatpush1.msra.mxu0 0.0
        %210 = vmatprep.subr.mxu0 0.0
        %211 = vmatpush1.msra.mxu0 0.0
        %212 = vmatprep.subr.mxu0 0.0
        %213 = vmatpush1.msra.mxu0 0.0
        %214 = vmatprep.subr.mxu0 0.0
        %215 = vmatpush1.msra.mxu0 0.0
        %216 = vmatprep.subr.mxu0 0.0
        %217 = vmatpush1.msra.mxu0 0.0
        %218 = vmatprep.subr.mxu0 0.0
        %219 = vmatpush1.msra.mxu0 0.0
        %220 = vmatprep.subr.mxu0 0.0
        %221 = vmatpush1.msra.mxu0 0.0
        %222 = vmatprep.mubr.f32.mxu0 0.0
        %223 = vmatmul.mubr.f32.gmra.mrb[0].mxu0 %v153
        %v224 = vpop.f32.mrb[0].mxu0
        %v225 = vadd.f32 0.0, %v224
        %v226 = vpop.f32.mrb[0].mxu0
        %227 = vmatprep.mubr.f32.mxu0 0.0
        %228 = vmatmul.mubr.f32.gmra.mrb[0].mxu0 %v156
        %v229 = vpop.f32.mrb[0].mxu0
        %v230 = vadd.f32 0.0, %v229
        %v231 = vpop.f32.mrb[0].mxu0
        %232 = vdwg.mxu0
        %233 = vst.msk [vmem:[%s137] sm:$0xff] %vm151, %v225
        %234 = vst.msk [vmem:[%s137 + $0x8] sm:$0xff] %vm151, %v230
        %237 = vrot.lane.b32.xlu0 %v225, 32
        %v238 = vpop.permute.xlu0 %237
        %239 = vrot.lane.b32.xlu0 %v230, 32
        %v240 = vpop.permute.xlu0 %239
        %vm243 = vcmask 523520
        %244 = vst.msk [vmem:[%s137] sm:$0xff] %vm243, %v238
        %245 = vst.msk [vmem:[%s137 + $0x8] sm:$0xff] %vm243, %v240
        %vm246 = vcmask 785920
        %247 = vst.msk [vmem:[%s137] sm:$0xff] %vm246, %v238
        %248 = vst.msk [vmem:[%s137 + $0x8] sm:$0xff] %vm246, %v240
        %249 = vrot.lane.b32.xlu0 %v225, 64
        %v250 = vpop.permute.xlu0 %249
        %251 = vrot.lane.b32.xlu0 %v230, 64
        %v252 = vpop.permute.xlu0 %251
        %vm255 = vcmask 1048320
        %256 = vst.msk [vmem:[%s137] sm:$0xff] %vm255, %v250
        %257 = vst.msk [vmem:[%s137 + $0x8] sm:$0xff] %vm255, %v252
        %s258 = sand.u32 %s71, 1
        %s259 = scalar_lea.sflag [#allocation3], %s258
        %s260 = sand.u32 %s71, 1
        %s261 = smul.addr %s260, 16
        %s262 = scalar_lea.vmem [#allocation2], %s261
        // Predicated region
        $region29: #{tpu_custom_call.1} parent=27 // pred_check
          %p263 = pneg %p81
        $region30: #{tpu_custom_call.1} parent=27 // pred_check_branch
          %265 = sbr.rel (%p263) target = $region32
        $region31: #{tpu_custom_call.1} parent=27 // pred_region
          %s266 = smul.u32 2, %s16
          %s268 = ssub.s32 256, 256
          %269 = vsyncadd %s259, %s268
          %s270 = smul.addr %s266, 128
          %s271 = scalar_lea.hbm %s2, %s270
          %s272 = sshll.u32 %s262, 4
          %s273 = int_to_ptr.vmem [resolvable:$true] %s272
          %278 = dma.vmem_to_hbm [thread:$0]  %s273, 256, %s271, %s259, 128, 128, 8
        $region32: #{tpu_custom_call.1} parent=27 // pred_fallthru
          _
      $region28: #{tpu_custom_call.1} parent=5 // pred_fallthru
        _
      %p279 = scmp.le.s32.totalorder 2, %s11
      // Predicated region
      $region33: #{tpu_custom_call.1} parent=5 // pred_check
        %p280 = pneg %p279
      $region34: #{tpu_custom_call.1} parent=5 // pred_check_branch
        %282 = sbr.rel (%p280) target = $region36
      $region35: #{tpu_custom_call.1} parent=5 // pred_region
        %s283 = ssub.s32 %s11, 2
        // Predicated region
        $region37: #{tpu_custom_call.1} parent=35 // pred_check
          %p284 = pneg %p87
        $region38: #{tpu_custom_call.1} parent=35 // pred_check_branch
          %286 = sbr.rel (%p284) target = $region40
        $region39: #{tpu_custom_call.1} parent=35 // pred_region
          %s287 = sand.u32 %s72, 1
          %s288 = scalar_lea.sflag [#allocation3], %s287
          %s289 = sand.u32 %s72, 1
          %s290 = smul.addr %s289, 16
          %s291 = scalar_lea.vmem [#allocation2], %s290
          %292 = dma.done %s288, 256
        $region40: #{tpu_custom_call.1} parent=35 // pred_fallthru
          _
      $region36: #{tpu_custom_call.1} parent=5 // pred_fallthru
        _
    $region6: #{tpu_custom_call.1} parent=1 // loop_footer
      %s15 = sadd.s32 1, %s11
    $region7: #{tpu_custom_call.1} parent=1 // loop_footer_branch
      %10 = sbr.rel target = $region3
    $region8: #{tpu_custom_call.1} parent=1 // loop_exit
      _
    %293 = vsyncpa [#allocation3], 1
    %s294 = scalar_lea.sflag [#allocation3], 1
    %295 = vsyncpa %s294, 1

</llo_original>
